<compile_context>
chip_gen: v6e
topology: v6e:2x2x1
jax: 0.10.0
libtpu: 0.0.40
codegen_flags: <defaults>
</compile_context>

<pallas_src>
import functools

import jax
import jax.numpy as jnp
import numpy as np
from jax.experimental import pallas as pl
from jax.experimental.pallas import tpu as pltpu


def question_attention_kernel(tl, batch, lf_ref, q_ref, w1_ref, b1_ref, w2_ref,
                              sel_ref, pback_ref, out_ref):
    """One grid step: a block of `tl` labels for the full batch, flat (tl*B, .) layout.

    lf_ref   : (tl*B, Dl)   bf16  label features, label-major flattening (streamed)
    q_ref    : (tl*B, Qp)   f32   question features tiled per label (resident)
    w1_ref   : (Dl, Qp)     bf16  effective (weight-normed) labels_att weight, transposed
    b1_ref   : (1, Qp)      f32   labels_att bias
    w2_ref   : (1, Qp)      f32   effective (weight-normed) full_att weight
    sel_ref  : (B, tl*B)    f32   one-hot batch selector   sel[b, l*B + b] = 1
    pback_ref: (tl*B, tl)   f32   one-hot label broadcaster pback[l*B + b, l] = 1
    out_ref  : (B, Qp)      f32   accumulated output (resident across label blocks)
    """
    qp = out_ref.shape[-1]

    @pl.when(pl.program_id(1) == 0)
    def _():
        out_ref[...] = jnp.zeros_like(out_ref)

    # labels_att: one bf16 MXU matmul for the whole label block, f32 accumulation.
    att1 = jnp.dot(lf_ref[...], w1_ref[...],
                   preferred_element_type=jnp.float32) + b1_ref[...]     # (tl*B, Qp)

    # relu(att1 + question.unsqueeze(0)); dropout is identity in eval mode.
    # TODO(synk): training-mode dropout (p=0.5) not implemented; kernel matches module.eval().
    h = jnp.maximum(att1 + q_ref[...], 0.0)                              # (tl*B, Qp)

    # full_att projection (minus its bias b2, which cancels in the per-label softmax):
    # VPU multiply + lane reduce; an N=1 MXU matmul would waste the MXU.
    hw = h * w2_ref[...]                                                 # (tl*B, Qp)
    s_flat = jnp.sum(hw, axis=-1, keepdims=True)                         # (tl*B, 1)

    # Per-label softmax over the batch axis (torch Softmax(dim=1) on (L, B, 1)),
    # expressed per flat row as exp(score - logsumexp_of_its_label).  Only the tiny
    # per-label logsumexp column crosses the (label, batch) grouping; it is broadcast
    # back to flat rows with a constant one-hot matmul, so the large att1/h/weighted
    # tensors never leave the 2-D lane-dense layout.
    s2 = jnp.sum(hw.reshape(tl, batch, qp), axis=-1)                     # (tl, B)
    m = jnp.max(s2, axis=-1, keepdims=True)                              # (tl, 1)
    lse = m + jnp.log(jnp.sum(jnp.exp(s2 - m), axis=-1, keepdims=True))  # (tl, 1)
    lse_flat = jnp.dot(pback_ref[...], lse,
                       preferred_element_type=jnp.float32)               # (tl*B, 1)
    alpha = jnp.exp(s_flat - lse_flat)                                   # (tl*B, 1)

    # (att1 * alpha).sum over labels for each batch row: one-hot selector matmul on the
    # MXU, accumulated straight into the VMEM-resident output block.
    out_ref[...] += jnp.dot(sel_ref[...], att1 * alpha,
                            preferred_element_type=jnp.float32)          # (B, Qp)


def question_attention(label_features, question_features, w1, b1, w2, *,
                       tl=None, num_cores=1):
    L, B, Dl = label_features.shape
    Q = w1.shape[1]
    Qp = ((Q + 127) // 128) * 128            # lane-dense last dim (>= 128)

    if tl is None:
        tl = L // num_cores                  # demo: single block per core
    assert L % (tl * num_cores) == 0, "tl * num_cores must divide L"
    blocks_per_core = L // (tl * num_cores)
    if num_cores * blocks_per_core > 1:
        # lf is bf16: a blocked (tl*B, Dl) tile needs 16-row sublane packing; ideally also
        # a multiple of the MXU M-quantum (256 on v6e/v7x, 128 on v5e).
        assert (tl * B) % 16 == 0, "tl*B must be a multiple of 16 when lf is blocked"

    # Wrapper-side layout plumbing (free): label-major flatten, zero-pad Q -> Qp, pre-tile
    # the question block, and build the tiny one-hot selector / broadcaster matrices.
    lf_flat = label_features.reshape(L * B, Dl).astype(jnp.bfloat16)
    w1p = jnp.pad(w1, ((0, 0), (0, Qp - Q))).astype(jnp.bfloat16)               # (Dl, Qp)
    b1p = jnp.pad(b1.reshape(1, Q), ((0, 0), (0, Qp - Q))).astype(jnp.float32)  # (1, Qp)
    w2p = jnp.pad(w2.reshape(1, Q), ((0, 0), (0, Qp - Q))).astype(jnp.float32)  # (1, Qp)
    q_tiled = jnp.tile(jnp.pad(question_features, ((0, 0), (0, Qp - Q))),
                       (tl, 1)).astype(jnp.float32)                             # (tl*B, Qp)
    rows = jnp.arange(tl * B)
    sel = (rows[None, :] % B == jnp.arange(B)[:, None]).astype(jnp.float32)       # (B, tl*B)
    pback = (rows[:, None] // B == jnp.arange(tl)[None, :]).astype(jnp.float32)   # (tl*B, tl)

    # VMEM budget: double-buffered streamed bf16 lf tile + residents + live f32
    # temporaries (att1 / hw / weighted).  Matters on v7x (64 MiB physical).
    est = (2 * tl * B * Dl * 2                        # lf, double buffered
           + (tl * B + B + 2) * Qp * 4                # q_tiled, out, b1, w2
           + Dl * Qp * 2 + (tl * B) * (B + tl) * 4    # w1, sel, pback
           + 3 * tl * B * Qp * 4)                     # live f32 temporaries
    vmem_limit = None if est <= 32 * 2**20 else int(min(est * 1.5, 64 * 2**20))

    grid_spec = pltpu.PrefetchScalarGridSpec(
        num_scalar_prefetch=0,
        grid=(num_cores, blocks_per_core),
        in_specs=[
            pl.BlockSpec((tl * B, Dl),
                         lambda c, i: (c * blocks_per_core + i, 0)),   # streamed label block
            pl.BlockSpec((tl * B, Qp), lambda c, i: (0, 0)),           # resident
            pl.BlockSpec((Dl, Qp), lambda c, i: (0, 0)),               # resident
            pl.BlockSpec((1, Qp), lambda c, i: (0, 0)),                # resident
            pl.BlockSpec((1, Qp), lambda c, i: (0, 0)),                # resident
            pl.BlockSpec((B, tl * B), lambda c, i: (0, 0)),            # resident
            pl.BlockSpec((tl * B, tl), lambda c, i: (0, 0)),           # resident
        ],
        # Constant index along the label-block (reduction, "arbitrary") axis keeps each
        # core's (B, Qp) partial VMEM-resident; the leading "parallel" axis lets v7x's
        # two TensorCores each own a private partial (summed in the wrapper below).
        out_specs=pl.BlockSpec((None, B, Qp), lambda c, i: (c, 0, 0)),
    )
    out = pl.pallas_call(
        functools.partial(question_attention_kernel, tl, B),
        out_shape=jax.ShapeDtypeStruct((num_cores, B, Qp), jnp.float32),
        grid_spec=grid_spec,
        compiler_params=pltpu.CompilerParams(
            dimension_semantics=("parallel", "arbitrary"),
            vmem_limit_bytes=vmem_limit),
    )(lf_flat, q_tiled, w1p, b1p, w2p, sel, pback)

    # Sum the per-core partials and drop the Q padding (both negligible XLA ops).
    return out.sum(axis=0)[:, :Q]


def init_params(key, label_dim, question_dim):
    """Deterministic init. weight_norm(Linear) is folded into an effective weight
    w = g * v / ||v||_row (PyTorch weight_norm default dim=0)."""
    k1, k2, k3, k4, k5, k6 = jax.random.split(key, 6)
    # labels_att: Linear(label_dim -> question_dim)
    v1 = jax.random.normal(k1, (question_dim, label_dim), jnp.float32) * 0.1
    g1 = jax.random.uniform(k2, (question_dim,), jnp.float32, minval=0.5, maxval=1.5)
    b1 = jax.random.normal(k3, (question_dim,), jnp.float32) * 0.1
    w1_eff = g1[:, None] * v1 / jnp.linalg.norm(v1, axis=1, keepdims=True)
    # full_att: Linear(question_dim -> 1)
    v2 = jax.random.normal(k4, (1, question_dim), jnp.float32) * 0.1
    g2 = jax.random.uniform(k5, (1,), jnp.float32, minval=0.5, maxval=1.5)
    b2 = jax.random.normal(k6, (1,), jnp.float32) * 0.1
    w2_eff = g2[:, None] * v2 / jnp.linalg.norm(v2, axis=1, keepdims=True)
    # pre-transpose labels_att weight for row-major matmul in the kernel
    return w1_eff.T, b1, w2_eff, b2


def reference(label_features, question_features, w1, b1, w2, b2):
    """Pure-JAX reference matching the PyTorch forward (eval mode), including b2."""
    att1 = jnp.einsum('lbd,dq->lbq', label_features, w1) + b1                # (L, B, Q)
    h = jnp.maximum(att1 + question_features[None, :, :], 0.0)
    scores = jnp.sum(h * w2.reshape(1, 1, -1), axis=-1, keepdims=True) + b2  # (L, B, 1)
    alpha = jax.nn.softmax(scores, axis=1)                                   # softmax over batch dim
    return jnp.sum(att1 * alpha, axis=0)                                     # (B, Q)


if __name__ == "__main__":
    key = jax.random.PRNGKey(0)
    L, B, label_dim, question_dim = 8, 2, 16, 32

    kp, kl, kq = jax.random.split(key, 3)
    w1, b1, w2, b2 = init_params(kp, label_dim, question_dim)
    label_features = jax.random.normal(kl, (L, B, label_dim), jnp.float32)
    question_features = jax.random.normal(kq, (B, question_dim), jnp.float32)

    out = question_attention(label_features, question_features, w1, b1, w2)
    out = jax.block_until_ready(out)

    # Reference is fed the same bf16-rounded MXU inputs so the comparison isolates the
    # kernel pipeline; tolerance covers f32-matmul pass precision on the tiny selector
    # matmuls and accumulation-order differences.
    lf_q = label_features.astype(jnp.bfloat16).astype(jnp.float32)
    w1_q = w1.astype(jnp.bfloat16).astype(jnp.float32)
    ref = reference(lf_q, question_features, w1_q, b1, w2, b2)
    np.testing.assert_allclose(np.asarray(out), np.asarray(ref), rtol=2e-2, atol=2e-2)
    print("KERNEL_OK")
</pallas_src>

<mosaic_0001>
module attributes {stable_mosaic.version = 11 : i64} {
  func.func @question_attention_kernel(%arg0: i32, %arg1: i32, %arg2: memref<16x16xbf16, #tpu.memory_space<vmem>>, %arg3: memref<16x128xf32, #tpu.memory_space<vmem>>, %arg4: memref<16x128xbf16, #tpu.memory_space<vmem>>, %arg5: memref<1x128xf32, #tpu.memory_space<vmem>>, %arg6: memref<1x128xf32, #tpu.memory_space<vmem>>, %arg7: memref<2x16xf32, #tpu.memory_space<vmem>>, %arg8: memref<16x8xf32, #tpu.memory_space<vmem>>, %arg9: memref<1x2x128xf32, #tpu.memory_space<vmem>>) attributes {dimension_semantics = [#tpu.dimension_semantics<parallel>, #tpu.dimension_semantics<arbitrary>], iteration_bounds = array<i64: 1, 1>, scalar_prefetch = 0 : i64, scratch_operands = 0 : i64, tpu.core_type = #tpu.core_type<tc>, window_params = [{transform_indices = @transform_0, window_bounds = array<i64: 16, 16>}, {pipeline_mode = #tpu.pipeline_mode<synchronous>, transform_indices = @transform_1, window_bounds = array<i64: 16, 128>}, {pipeline_mode = #tpu.pipeline_mode<synchronous>, transform_indices = @transform_2, window_bounds = array<i64: 16, 128>}, {pipeline_mode = #tpu.pipeline_mode<synchronous>, transform_indices = @transform_3, window_bounds = array<i64: 1, 128>}, {pipeline_mode = #tpu.pipeline_mode<synchronous>, transform_indices = @transform_4, window_bounds = array<i64: 1, 128>}, {pipeline_mode = #tpu.pipeline_mode<synchronous>, transform_indices = @transform_5, window_bounds = array<i64: 2, 16>}, {pipeline_mode = #tpu.pipeline_mode<synchronous>, transform_indices = @transform_6, window_bounds = array<i64: 16, 8>}, {transform_indices = @transform_7, window_bounds = array<i64: 1, 2, 128>}]} {
    %c0_i32 = arith.constant 0 : i32
    %0 = arith.cmpi eq, %arg1, %c0_i32 : i32
    %1 = arith.extui %0 : i1 to i32
    %c0_i32_0 = arith.constant 0 : i32
    %2 = arith.cmpi ne, %1, %c0_i32_0 : i32
    scf.if %2 {
      %cst_27 = arith.constant 0.000000e+00 : f32
      %43 = vector.broadcast %cst_27 : f32 to vector<2x128xf32>
      %c0_28 = arith.constant 0 : index
      %c0_29 = arith.constant 0 : index
      %c0_30 = arith.constant 0 : index
      %44 = vector.load %arg9[%c0_28, %c0_29, %c0_30] : memref<1x2x128xf32, #tpu.memory_space<vmem>>, vector<1x2x128xf32>
      %45 = vector.shape_cast %44 : vector<1x2x128xf32> to vector<2x128xf32>
      %46 = vector.shape_cast %43 : vector<2x128xf32> to vector<1x2x128xf32>
      tpu.vector_store %arg9[%c0_28, %c0_29, %c0_30], %46 {strides = array<i32>} : memref<1x2x128xf32, #tpu.memory_space<vmem>>, vector<1x2x128xf32>,
    } else {
    }
    %c0 = arith.constant 0 : index
    %c0_1 = arith.constant 0 : index
    %3 = vector.load %arg2[%c0, %c0_1] : memref<16x16xbf16, #tpu.memory_space<vmem>>, vector<16x16xbf16>
    %c0_2 = arith.constant 0 : index
    %c0_3 = arith.constant 0 : index
    %4 = vector.load %arg4[%c0_2, %c0_3] : memref<16x128xbf16, #tpu.memory_space<vmem>>, vector<16x128xbf16>
    %cst = arith.constant dense<0.000000e+00> : vector<16x128xf32>
    %5 = tpu.matmul %3, %4, %cst {dimension_numbers = #tpu.dot_dimension_numbers<[1], [0], [0], [1], [0, 0, 1, 1], [], []>} : vector<16x16xbf16>, vector<16x128xbf16>, vector<16x128xf32> -> vector<16x128xf32>
    %c0_4 = arith.constant 0 : index
    %c0_5 = arith.constant 0 : index
    %6 = vector.load %arg5[%c0_4, %c0_5] : memref<1x128xf32, #tpu.memory_space<vmem>>, vector<1x128xf32>
    %7 = vector.broadcast %6 : vector<1x128xf32> to vector<16x128xf32>
    %8 = arith.addf %5, %7 : vector<16x128xf32>
    %c0_6 = arith.constant 0 : index
    %c0_7 = arith.constant 0 : index
    %9 = vector.load %arg3[%c0_6, %c0_7] : memref<16x128xf32, #tpu.memory_space<vmem>>, vector<16x128xf32>
    %10 = arith.addf %8, %9 : vector<16x128xf32>
    %cst_8 = arith.constant 0.000000e+00 : f32
    %11 = vector.broadcast %cst_8 : f32 to vector<16x128xf32>
    %12 = arith.maximumf %10, %11 : vector<16x128xf32>
    %c0_9 = arith.constant 0 : index
    %c0_10 = arith.constant 0 : index
    %13 = vector.load %arg6[%c0_9, %c0_10] : memref<1x128xf32, #tpu.memory_space<vmem>>, vector<1x128xf32>
    %14 = vector.broadcast %13 : vector<1x128xf32> to vector<16x128xf32>
    %15 = arith.mulf %12, %14 : vector<16x128xf32>
    %cst_11 = arith.constant dense<0.000000e+00> : vector<16xf32>
    %16 = vector.multi_reduction <add>, %15, %cst_11 [1] : vector<16x128xf32> to vector<16xf32>
    %17 = vector.shape_cast %16 : vector<16xf32> to vector<16x1xf32>
    %18 = vector.shape_cast %15 : vector<16x128xf32> to vector<8x2x128xf32>
    %cst_12 = arith.constant dense<0.000000e+00> : vector<8x2xf32>
    %19 = vector.multi_reduction <add>, %18, %cst_12 [2] : vector<8x2x128xf32> to vector<8x2xf32>
    %cst_13 = arith.constant dense<0xFF800000> : vector<8xf32>
    %20 = vector.multi_reduction <maximumf>, %19, %cst_13 [1] : vector<8x2xf32> to vector<8xf32>
    %21 = vector.shape_cast %20 : vector<8xf32> to vector<8x1xf32>
    %22 = vector.broadcast %21 : vector<8x1xf32> to vector<8x2xf32>
    %23 = arith.subf %19, %22 : vector<8x2xf32>
    %24 = math.exp %23 : vector<8x2xf32>
    %cst_14 = arith.constant dense<0.000000e+00> : vector<8xf32>
    %25 = vector.multi_reduction <add>, %24, %cst_14 [1] : vector<8x2xf32> to vector<8xf32>
    %26 = vector.shape_cast %25 : vector<8xf32> to vector<8x1xf32>
    %27 = math.log %26 : vector<8x1xf32>
    %28 = arith.addf %21, %27 : vector<8x1xf32>
    %c0_15 = arith.constant 0 : index
    %c0_16 = arith.constant 0 : index
    %29 = vector.load %arg8[%c0_15, %c0_16] : memref<16x8xf32, #tpu.memory_space<vmem>>, vector<16x8xf32>
    %cst_17 = arith.constant dense<0.000000e+00> : vector<16x1xf32>
    %30 = tpu.matmul %29, %28, %cst_17 {dimension_numbers = #tpu.dot_dimension_numbers<[1], [0], [0], [1], [0, 0, 1, 1], [], []>} : vector<16x8xf32>, vector<8x1xf32>, vector<16x1xf32> -> vector<16x1xf32>
    %31 = arith.subf %17, %30 : vector<16x1xf32>
    %32 = math.exp %31 : vector<16x1xf32>
    %c0_18 = arith.constant 0 : index
    %c0_19 = arith.constant 0 : index
    %c0_20 = arith.constant 0 : index
    %33 = vector.load %arg9[%c0_18, %c0_19, %c0_20] : memref<1x2x128xf32, #tpu.memory_space<vmem>>, vector<1x2x128xf32>
    %34 = vector.shape_cast %33 : vector<1x2x128xf32> to vector<2x128xf32>
    %c0_21 = arith.constant 0 : index
    %c0_22 = arith.constant 0 : index
    %35 = vector.load %arg7[%c0_21, %c0_22] : memref<2x16xf32, #tpu.memory_space<vmem>>, vector<2x16xf32>
    %36 = vector.broadcast %32 : vector<16x1xf32> to vector<16x128xf32>
    %37 = arith.mulf %8, %36 : vector<16x128xf32>
    %cst_23 = arith.constant dense<0.000000e+00> : vector<2x128xf32>
    %38 = tpu.matmul %35, %37, %cst_23 {dimension_numbers = #tpu.dot_dimension_numbers<[1], [0], [0], [1], [0, 0, 1, 1], [], []>} : vector<2x16xf32>, vector<16x128xf32>, vector<2x128xf32> -> vector<2x128xf32>
    %39 = arith.addf %34, %38 : vector<2x128xf32>
    %c0_24 = arith.constant 0 : index
    %c0_25 = arith.constant 0 : index
    %c0_26 = arith.constant 0 : index
    %40 = vector.load %arg9[%c0_24, %c0_25, %c0_26] : memref<1x2x128xf32, #tpu.memory_space<vmem>>, vector<1x2x128xf32>
    %41 = vector.shape_cast %40 : vector<1x2x128xf32> to vector<2x128xf32>
    %42 = vector.shape_cast %39 : vector<2x128xf32> to vector<1x2x128xf32>
    tpu.vector_store %arg9[%c0_24, %c0_25, %c0_26], %42 {strides = array<i32>} : memref<1x2x128xf32, #tpu.memory_space<vmem>>, vector<1x2x128xf32>,
    return
  }
  func.func @transform_0(%arg0: i32, %arg1: i32) -> (i32, i32) {
    %c1_i32 = arith.constant 1 : i32
    %0 = arith.muli %arg0, %c1_i32 : i32
    %1 = arith.addi %0, %arg1 : i32
    %c0_i32 = arith.constant 0 : i32
    %c0_i32_0 = arith.constant 0 : i32
    return %1, %c0_i32 : i32, i32
  }
  func.func @transform_1(%arg0: i32, %arg1: i32) -> (i32, i32) {
    %c0_i32 = arith.constant 0 : i32
    %c0_i32_0 = arith.constant 0 : i32
    %c0_i32_1 = arith.constant 0 : i32
    return %c0_i32, %c0_i32_0 : i32, i32
  }
  func.func @transform_2(%arg0: i32, %arg1: i32) -> (i32, i32) {
    %c0_i32 = arith.constant 0 : i32
    %c0_i32_0 = arith.constant 0 : i32
    %c0_i32_1 = arith.constant 0 : i32
    return %c0_i32, %c0_i32_0 : i32, i32
  }
  func.func @transform_3(%arg0: i32, %arg1: i32) -> (i32, i32) {
    %c0_i32 = arith.constant 0 : i32
    %c0_i32_0 = arith.constant 0 : i32
    %c0_i32_1 = arith.constant 0 : i32
    return %c0_i32, %c0_i32_0 : i32, i32
  }
  func.func @transform_4(%arg0: i32, %arg1: i32) -> (i32, i32) {
    %c0_i32 = arith.constant 0 : i32
    %c0_i32_0 = arith.constant 0 : i32
    %c0_i32_1 = arith.constant 0 : i32
    return %c0_i32, %c0_i32_0 : i32, i32
  }
  func.func @transform_5(%arg0: i32, %arg1: i32) -> (i32, i32) {
    %c0_i32 = arith.constant 0 : i32
    %c0_i32_0 = arith.constant 0 : i32
    %c0_i32_1 = arith.constant 0 : i32
    return %c0_i32, %c0_i32_0 : i32, i32
  }
  func.func @transform_6(%arg0: i32, %arg1: i32) -> (i32, i32) {
    %c0_i32 = arith.constant 0 : i32
    %c0_i32_0 = arith.constant 0 : i32
    %c0_i32_1 = arith.constant 0 : i32
    return %c0_i32, %c0_i32_0 : i32, i32
  }
  func.func @transform_7(%arg0: i32, %arg1: i32) -> (i32, i32, i32) {
    %c0_i32 = arith.constant 0 : i32
    %c0_i32_0 = arith.constant 0 : i32
    %c0_i32_1 = arith.constant 0 : i32
    return %arg0, %c0_i32, %c0_i32_0 : i32, i32, i32
  }
}

</mosaic_0001>

<llo_original>
// kernel: tpu_custom_call.1
$region0: #{tpu_custom_call.1}
  #allocation0 [shape = 'u32[]', space=smem, size = 0x4, offset = 0x4, fixed_abs, tag = 'smem constant byte address 0x4 - core index']
  #allocation1 [shape = 'u32[144,128]{1,0:T(1,128)}', space=vmem, size = 0x12000, scoped, tag = 'internal scratch']
  %s0 = inlined_call_operand.vmem [shape: bf16[16,16], index: 0, kind: input, shape index: {}]
  %s1 = inlined_call_operand.vmem [shape: f32[16,128], index: 1, kind: input, shape index: {}]
  %s2 = inlined_call_operand.hbm [shape: bf16[16,128], index: 2, kind: input, shape index: {}]
  %s3 = inlined_call_operand.hbm [shape: f32[1,128], index: 3, kind: input, shape index: {}]
  %s4 = inlined_call_operand.hbm [shape: f32[1,128], index: 4, kind: input, shape index: {}]
  %s5 = inlined_call_operand.vmem [shape: f32[2,16], index: 5, kind: input, shape index: {}]
  %s6 = inlined_call_operand.vmem [shape: f32[16,8], index: 6, kind: input, shape index: {}]
  %s7 = inlined_call_operand.hbm [shape: f32[1,2,128], index: 7, kind: output, shape index: {}]
  %s8 = sld [smem:[#allocation0]]
  $region54: #{tpu_custom_call.1} parent=0
    _
  %s10 = ssub.s32 1, %s8
  %s11 = scalar_select 0, %s10, %s8
  $region1: #{tpu_custom_call.1} parent=0
    #allocation2 [shape = 'u8[4096]{0}', space=vmem, size = 0x1000, scoped, tag = 'input window, operand 2, single buffered']
    #allocation3 [shape = 's32[1]{0}', space=sflag, size = 0x4, scoped, tag = 'scoped memory for tpu_custom_call.1']
    #allocation4 [shape = 's32[1]{0}', space=sflag, size = 0x4, scoped, tag = 'scoped memory for tpu_custom_call.1']
    #allocation5 [shape = 'u8[512]{0}', space=vmem, size = 0x400, scoped, tag = 'input window, operand 3, single buffered']
    #allocation6 [shape = 's32[1]{0}', space=sflag, size = 0x4, scoped, tag = 'scoped memory for tpu_custom_call.1']
    #allocation7 [shape = 'u8[512]{0}', space=vmem, size = 0x400, scoped, tag = 'input window, operand 4, single buffered']
    #allocation8 [shape = 'u8[1024]{0}', space=vmem, size = 0x400, scoped, tag = 'output window, operand 0, single buffered']
    %12 = vsyncpa [#allocation3], 0
    %13 = vsyncpa [#allocation6], 0
    %14 = vsyncpa [#allocation4], 0
    // Predicated region
    $region2: #{tpu_custom_call.1} parent=1 // pred_check
      _
    $region3: #{tpu_custom_call.1} parent=1 // pred_check_branch
      %16 = sbr.rel (0) target = $region5
    $region4: #{tpu_custom_call.1} parent=1 // pred_region
      %s17 = sadd.s32 0, 0
      %s18 = smul.u32 2, %s17
      %p19 = scmp.lt.s32.totalorder %s18, 1
      %s20 = scalar_select %p19, %s18, 1
      %s21 = smul.addr %s20, 4
      %s22 = scalar_lea.vmem %s0, %s21
      %s23 = sadd.s32 0, 0
      %s24 = smul.u32 2, %s23
    $region5: #{tpu_custom_call.1} parent=1 // pred_fallthru
      _
    // Predicated region
    $region6: #{tpu_custom_call.1} parent=1 // pred_check
      _
    $region7: #{tpu_custom_call.1} parent=1 // pred_check_branch
      %26 = sbr.rel (0) target = $region9
    $region8: #{tpu_custom_call.1} parent=1 // pred_region
      _
    $region9: #{tpu_custom_call.1} parent=1 // pred_fallthru
      _
    // Predicated region
    $region10: #{tpu_custom_call.1} parent=1 // pred_check
      _
    $region11: #{tpu_custom_call.1} parent=1 // pred_check_branch
      %28 = sbr.rel (0) target = $region13
    $region12: #{tpu_custom_call.1} parent=1 // pred_region
      %s30 = ssub.s32 128, 128
      %31 = vsyncadd [#allocation3], %s30
      %s32 = sshll.u32 [#allocation2], 4
      %s33 = int_to_ptr.vmem [resolvable:$true] %s32
      %38 = dma.hbm_to_vmem [thread:$0]  %s2, 128, %s33, [#allocation3], 64, 64, 4
    $region13: #{tpu_custom_call.1} parent=1 // pred_fallthru
      _
    // Predicated region
    $region14: #{tpu_custom_call.1} parent=1 // pred_check
      _
    $region15: #{tpu_custom_call.1} parent=1 // pred_check_branch
      %40 = sbr.rel (0) target = $region17
    $region16: #{tpu_custom_call.1} parent=1 // pred_region
      %s42 = ssub.s32 16, 16
      %43 = vsyncadd [#allocation6], %s42
      %s45 = sshll.u32 [#allocation5], 4
      %s46 = int_to_ptr.vmem [resolvable:$true] %s45
      %48 = dma.hbm_to_vmem [thread:$0]  %s3, 16, %s46, [#allocation6]
    $region17: #{tpu_custom_call.1} parent=1 // pred_fallthru
      _
    // Predicated region
    $region18: #{tpu_custom_call.1} parent=1 // pred_check
      _
    $region19: #{tpu_custom_call.1} parent=1 // pred_check_branch
      %50 = sbr.rel (0) target = $region21
    $region20: #{tpu_custom_call.1} parent=1 // pred_region
      %s52 = ssub.s32 16, 16
      %53 = vsyncadd [#allocation6], %s52
      %s55 = sshll.u32 [#allocation7], 4
      %s56 = int_to_ptr.vmem [resolvable:$true] %s55
      %58 = dma.hbm_to_vmem [thread:$0]  %s4, 16, %s56, [#allocation6]
    $region21: #{tpu_custom_call.1} parent=1 // pred_fallthru
      _
    // Predicated region
    $region22: #{tpu_custom_call.1} parent=1 // pred_check
      _
    $region23: #{tpu_custom_call.1} parent=1 // pred_check_branch
      %60 = sbr.rel (0) target = $region25
    $region24: #{tpu_custom_call.1} parent=1 // pred_region
      _
    $region25: #{tpu_custom_call.1} parent=1 // pred_fallthru
      _
    // Predicated region
    $region26: #{tpu_custom_call.1} parent=1 // pred_check
      _
    $region27: #{tpu_custom_call.1} parent=1 // pred_check_branch
      %62 = sbr.rel (0) target = $region29
    $region28: #{tpu_custom_call.1} parent=1 // pred_region
      _
    $region29: #{tpu_custom_call.1} parent=1 // pred_fallthru
      _
    // Predicated region
    $region30: #{tpu_custom_call.1} parent=1 // pred_check
      _
    $region31: #{tpu_custom_call.1} parent=1 // pred_check_branch
      %64 = sbr.rel (0) target = $region33
    $region32: #{tpu_custom_call.1} parent=1 // pred_region
      %65 = dma.done [#allocation3], 128
    $region33: #{tpu_custom_call.1} parent=1 // pred_fallthru
      _
    // Predicated region
    $region34: #{tpu_custom_call.1} parent=1 // pred_check
      _
    $region35: #{tpu_custom_call.1} parent=1 // pred_check_branch
      %67 = sbr.rel (0) target = $region37
    $region36: #{tpu_custom_call.1} parent=1 // pred_region
      %68 = dma.done [#allocation6], 16
    $region37: #{tpu_custom_call.1} parent=1 // pred_fallthru
      _
    // Predicated region
    $region38: #{tpu_custom_call.1} parent=1 // pred_check
      _
    $region39: #{tpu_custom_call.1} parent=1 // pred_check_branch
      %70 = sbr.rel (0) target = $region41
    $region40: #{tpu_custom_call.1} parent=1 // pred_region
      %71 = dma.done [#allocation6], 16
    $region41: #{tpu_custom_call.1} parent=1 // pred_fallthru
      _
    %s72 = sadd.s32 0, 0
    %s73 = smul.u32 2, %s72
    %p74 = scmp.lt.s32.totalorder %s73, 1
    %s75 = scalar_select %p74, %s73, 1
    %s76 = smul.addr %s75, 4
    %s77 = scalar_lea.vmem %s0, %s76
    %s78 = sadd.s32 0, 0
    %s79 = smul.u32 2, %s78
    %p80 = scmp.lt.s32.totalorder %s79, 1
    %s81 = scalar_select %p80, %s79, 1
    %s82 = smul.addr %s81, 4
    %s83 = scalar_lea.vmem %s0, %s82
    %s84 = sadd.s32 0, 0
    %s85 = smul.u32 2, %s84
    %p87 = scmp.eq.s32.totalorder 0, 0
    // Predicated region
    $region42: #{tpu_custom_call.1} parent=1 // pred_check
      %p88 = pneg %p87
    $region43: #{tpu_custom_call.1} parent=1 // pred_check_branch
      %90 = sbr.rel (%p88) target = $region45
    $region44: #{tpu_custom_call.1} parent=1 // pred_region
      %91 = vst [vmem:[#allocation8] sm:$0x3] 0.0
    $region45: #{tpu_custom_call.1} parent=1 // pred_fallthru
      _
    %v92 = vld [vmem:[%s83] sm:$0xf]
    %v93 = vld [vmem:[%s83 + $0x4] sm:$0xf]
    %v94 = vld [vmem:[#allocation2] sm:$0xf]
    %v95 = vld [vmem:[#allocation2 + $0x4] sm:$0xf]
    %v96 = vld [vmem:[#allocation5] sm:$0x1]
    %v98 = vlaneseq
    %v99 = vshrl.u32 %v98, 7
    %v100 = vsub.s32 0, %v99
    %v101 = vrot.slane %v96, %v100
    %v105 = vunpack.c.l.b16 %v92
    %v106 = vunpack.c.l.b16 %v93
    %v107 = vpack.c.b16 %v106, %v105
    %v110 = vunpack.c.l.b16 %v94
    %v111 = vunpack.c.l.b16 %v95
    %v112 = vpack.c.b16 %v111, %v110
    %vm114 = vcmask 130048
    %v116 = vsel %vm114, %v107, 0
    %118 = vmatprep.subr.bf16.mxu0 0
    %119 = vmatpush1.bf16.msra.mxu0 0
    %120 = vmatprep.subr.bf16.mxu0 0
    %121 = vmatpush1.bf16.msra.mxu0 0
    %122 = vmatprep.subr.bf16.mxu0 0
    %123 = vmatpush1.bf16.msra.mxu0 0
    %124 = vmatprep.subr.bf16.mxu0 0
    %125 = vmatpush1.bf16.msra.mxu0 0
    %126 = vmatprep.subr.bf16.mxu0 0
    %127 = vmatpush1.bf16.msra.mxu0 0
    %128 = vmatprep.subr.bf16.mxu0 0
    %129 = vmatpush1.bf16.msra.mxu0 0
    %130 = vmatprep.subr.bf16.mxu0 0
    %131 = vmatpush1.bf16.msra.mxu0 0
    %132 = vmatprep.subr.bf16.mxu0 0
    %133 = vmatpush1.bf16.msra.mxu0 %v112
    %134 = vmatprep.subr.bf16.mxu0 0
    %135 = vmatpush2.bf16.msra.mxu0 0
    %136 = vmatprep.subr.bf16.mxu0 0
    %137 = vmatpush2.bf16.msra.mxu0 0
    %138 = vmatprep.subr.bf16.mxu0 0
    %139 = vmatpush2.bf16.msra.mxu0 0
    %140 = vmatprep.subr.bf16.mxu0 0
    %141 = vmatpush2.bf16.msra.mxu0 0
    %142 = vmatprep.subr.bf16.mxu0 0
    %143 = vmatpush2.bf16.msra.mxu0 0
    %144 = vmatprep.subr.bf16.mxu0 0
    %145 = vmatpush2.bf16.msra.mxu0 0
    %146 = vmatprep.subr.bf16.mxu0 0
    %147 = vmatpush2.bf16.msra.mxu0 0
    %148 = vmatprep.subr.bf16.mxu0 0
    %149 = vmatpush2.bf16.msra.mxu0 0
    %150 = vmatprep.mubr.bf16.mxu0 0
    %151 = vmatmul.mubr.bf16.gmra.mxu0 %v116
    %v152 = vpop.f32.mrf.mxu0
    %v153 = vadd.f32 %v101, %v152
    %v154 = vpop.f32.mrf.mxu0
    %v155 = vpop.f32.mrf.mxu0
    %v156 = vadd.f32 %v101, %v155
    %v157 = vpop.f32.mrf.mxu0
    %158 = vdwg.mxu0
    %v159 = vld [vmem:[%s1] sm:$0xff]
    %v160 = vld [vmem:[%s1 + $0x8] sm:$0xff]
    %v161 = vadd.f32 %v153, %v159
    %v162 = vadd.f32 %v156, %v160
    %v163 = vmax.f32 %v161, 0.0
    %v164 = vmax.f32 %v162, 0.0
    %v165 = vld [vmem:[#allocation7] sm:$0x1]
    %v167 = vlaneseq
    %v168 = vshrl.u32 %v167, 7
    %v169 = vsub.s32 0, %v168
    %v170 = vrot.slane %v165, %v169
    %v172 = vmul.f32 %v163, %v170
    %v173 = vmul.f32 %v164, %v170
    %174 = vadd.xlane.f32.xlu0 %v172
    %v175 = vpop.xlane.xlu0 %174
    %176 = vadd.xlane.f32.xlu0 %v173
    %v177 = vpop.xlane.xlu0 %176
    %v180 = vcombine.high %v172, %v172
    %v182 = vunpack.c.l.s4 1983009808
    %v183 = vunpack.c.0.s8 %v182
    %v184 = vlaneseq
    %v185 = vshrl.u32 %v184, 7
    %v186 = vsub.s32 %v183, %v185
    %v187 = vrot.slane %v172, %v186
    %v189 = vunpack.c.l.s4 1983009808
    %v190 = vunpack.c.0.s8 %v189
    %v191 = vlaneseq
    %v192 = vshrl.u32 %v191, 7
    %v193 = vsub.s32 %v190, %v192
    %v194 = vrot.slane %v180, %v193
    %v195 = vcombine.high %v187, %v187
    %v196 = vcombine.high %v194, %v194
    %v197 = vcombine.high %v173, %v173
    %v199 = vunpack.c.l.s4 1983009808
    %v200 = vunpack.c.0.s8 %v199
    %v201 = vlaneseq
    %v202 = vshrl.u32 %v201, 7
    %v203 = vsub.s32 %v200, %v202
    %v204 = vrot.slane %v173, %v203
    %v206 = vunpack.c.l.s4 1983009808
    %v207 = vunpack.c.0.s8 %v206
    %v208 = vlaneseq
    %v209 = vshrl.u32 %v208, 7
    %v210 = vsub.s32 %v207, %v209
    %v211 = vrot.slane %v197, %v210
    %v212 = vcombine.high %v204, %v204
    %v213 = vcombine.high %v211, %v211
    %vm222 = vcmask 1041408
    %v223 = vsel %vm222, %v187, 0.0
    %224 = vadd.xlane.f32.xlu0 %v223
    %v225 = vpop.xlane.xlu0 %224
    %v226 = vsel %vm222, %v195, 0.0
    %227 = vadd.xlane.f32.xlu0 %v226
    %v228 = vpop.xlane.xlu0 %227
    %v229 = vsel %vm222, %v194, 0.0
    %230 = vadd.xlane.f32.xlu0 %v229
    %v231 = vpop.xlane.xlu0 %230
    %v232 = vsel %vm222, %v196, 0.0
    %233 = vadd.xlane.f32.xlu0 %v232
    %v234 = vpop.xlane.xlu0 %233
    %v235 = vsel %vm222, %v204, 0.0
    %236 = vadd.xlane.f32.xlu0 %v235
    %v237 = vpop.xlane.xlu0 %236
    %v238 = vsel %vm222, %v212, 0.0
    %239 = vadd.xlane.f32.xlu0 %v238
    %v240 = vpop.xlane.xlu0 %239
    %v241 = vsel %vm222, %v211, 0.0
    %242 = vadd.xlane.f32.xlu0 %v241
    %v243 = vpop.xlane.xlu0 %242
    %v244 = vsel %vm222, %v213, 0.0
    %245 = vadd.xlane.f32.xlu0 %v244
    %v246 = vpop.xlane.xlu0 %245
    %v255 = vlaneseq
    %v256 = vand.u32 %v255, 127
    %v257 = vlaneseq
    %v258 = vshrl.u32 %v257, 7
    %v259 = vsub.s32 %v256, %v258
    %v260 = vrot.slane %v225, %v259
    %v261 = vlaneseq
    %v262 = vshrl.u32 %v261, 7
    %v263 = vsub.s32 %v256, %v262
    %v264 = vrot.slane %v228, %v263
    %v265 = vlaneseq
    %v266 = vshrl.u32 %v265, 7
    %v267 = vsub.s32 %v256, %v266
    %v268 = vrot.slane %v231, %v267
    %v269 = vlaneseq
    %v270 = vshrl.u32 %v269, 7
    %v271 = vsub.s32 %v256, %v270
    %v272 = vrot.slane %v234, %v271
    %v273 = vlaneseq
    %v274 = vshrl.u32 %v273, 7
    %v275 = vsub.s32 %v256, %v274
    %v276 = vrot.slane %v237, %v275
    %v277 = vlaneseq
    %v278 = vshrl.u32 %v277, 7
    %v279 = vsub.s32 %v256, %v278
    %v280 = vrot.slane %v240, %v279
    %v281 = vlaneseq
    %v282 = vshrl.u32 %v281, 7
    %v283 = vsub.s32 %v256, %v282
    %v284 = vrot.slane %v243, %v283
    %v285 = vlaneseq
    %v286 = vshrl.u32 %v285, 7
    %v287 = vsub.s32 %v256, %v286
    %v288 = vrot.slane %v246, %v287
    %vm289 = vcmask 1041409
    %v290 = vsel %vm289, %v264, %v260
    %vm291 = vcmask 1042434
    %v292 = vsel %vm291, %v268, %v290
    %vm293 = vcmask 1043459
    %v294 = vsel %vm293, %v272, %v292
    %vm295 = vcmask 1044484
    %v296 = vsel %vm295, %v276, %v294
    %vm297 = vcmask 1045509
    %v298 = vsel %vm297, %v280, %v296
    %vm299 = vcmask 1046534
    %v300 = vsel %vm299, %v284, %v298
    %vm301 = vcmask 1047559
    %v302 = vsel %vm301, %v288, %v300
    %vm304 = vcmask 15360
    %v305 = vsel %vm304, %v302, -inf
    %306 = vmax.xlane.f32.xlu0 %v305
    %v307 = vpop.xlane.xlu0 %306
    %v309 = vlaneseq
    %v310 = vshrl.u32 %v309, 7
    %v311 = vsub.s32 0, %v310
    %v312 = vrot.slane %v307, %v311
    %v313 = vlaneseq
    %v314 = vshrl.u32 %v313, 7
    %v315 = vsub.s32 1, %v314
    %v316 = vrot.slane %v307, %v315
    %v317 = vlaneseq
    %v318 = vshrl.u32 %v317, 7
    %v319 = vsub.s32 2, %v318
    %v320 = vrot.slane %v307, %v319
    %v321 = vlaneseq
    %v322 = vshrl.u32 %v321, 7
    %v323 = vsub.s32 3, %v322
    %v324 = vrot.slane %v307, %v323
    %v325 = vlaneseq
    %v326 = vshrl.u32 %v325, 7
    %v327 = vsub.s32 4, %v326
    %v328 = vrot.slane %v307, %v327
    %v329 = vlaneseq
    %v330 = vshrl.u32 %v329, 7
    %v331 = vsub.s32 5, %v330
    %v332 = vrot.slane %v307, %v331
    %v333 = vlaneseq
    %v334 = vshrl.u32 %v333, 7
    %v335 = vsub.s32 6, %v334
    %v336 = vrot.slane %v307, %v335
    %v337 = vlaneseq
    %v338 = vshrl.u32 %v337, 7
    %v339 = vsub.s32 7, %v338
    %v340 = vrot.slane %v307, %v339
    %v349 = vsub.f32 %v225, %v312
    %v350 = vsub.f32 %v228, %v316
    %v351 = vsub.f32 %v231, %v320
    %v352 = vsub.f32 %v234, %v324
    %v353 = vsub.f32 %v237, %v328
    %v354 = vsub.f32 %v240, %v332
    %v355 = vsub.f32 %v243, %v336
    %v356 = vsub.f32 %v246, %v340
    %v357 = vmul.f32 %v349, 1.442695
    %v358 = vpow.pop %v357
    %v359 = vmul.f32 %v350, 1.442695
    %v360 = vpow.pop %v359
    %v361 = vmul.f32 %v351, 1.442695
    %v362 = vpow.pop %v361
    %v363 = vmul.f32 %v352, 1.442695
    %v364 = vpow.pop %v363
    %v365 = vmul.f32 %v353, 1.442695
    %v366 = vpow.pop %v365
    %v367 = vmul.f32 %v354, 1.442695
    %v368 = vpow.pop %v367
    %v369 = vmul.f32 %v355, 1.442695
    %v370 = vpow.pop %v369
    %v371 = vmul.f32 %v356, 1.442695
    %v372 = vpow.pop %v371
    %381 = vset.pattern.permute.xlu0 0
    %382 = vperm.xlu0 %381, %v358
    %v383 = vpop.permute.xlu0 %382
    %384 = vset.pattern.permute.xlu0 0
    %385 = vperm.xlu0 %384, %v360
    %v386 = vpop.permute.xlu0 %385
    %387 = vset.pattern.permute.xlu0 0
    %388 = vperm.xlu0 %387, %v362
    %v389 = vpop.permute.xlu0 %388
    %390 = vset.pattern.permute.xlu0 0
    %391 = vperm.xlu0 %390, %v364
    %v392 = vpop.permute.xlu0 %391
    %393 = vset.pattern.permute.xlu0 0
    %394 = vperm.xlu0 %393, %v366
    %v395 = vpop.permute.xlu0 %394
    %396 = vset.pattern.permute.xlu0 0
    %397 = vperm.xlu0 %396, %v368
    %v398 = vpop.permute.xlu0 %397
    %399 = vset.pattern.permute.xlu0 0
    %400 = vperm.xlu0 %399, %v370
    %v401 = vpop.permute.xlu0 %400
    %402 = vset.pattern.permute.xlu0 0
    %403 = vperm.xlu0 %402, %v372
    %v404 = vpop.permute.xlu0 %403
    %v405 = vlaneseq
    %v406 = vshrl.u32 %v405, 7
    %v407 = vsub.s32 %v256, %v406
    %v408 = vrot.slane %v383, %v407
    %v409 = vlaneseq
    %v410 = vshrl.u32 %v409, 7
    %v411 = vsub.s32 %v256, %v410
    %v412 = vrot.slane %v386, %v411
    %v413 = vlaneseq
    %v414 = vshrl.u32 %v413, 7
    %v415 = vsub.s32 %v256, %v414
    %v416 = vrot.slane %v389, %v415
    %v417 = vlaneseq
    %v418 = vshrl.u32 %v417, 7
    %v419 = vsub.s32 %v256, %v418
    %v420 = vrot.slane %v392, %v419
    %v421 = vlaneseq
    %v422 = vshrl.u32 %v421, 7
    %v423 = vsub.s32 %v256, %v422
    %v424 = vrot.slane %v395, %v423
    %v425 = vlaneseq
    %v426 = vshrl.u32 %v425, 7
    %v427 = vsub.s32 %v256, %v426
    %v428 = vrot.slane %v398, %v427
    %v429 = vlaneseq
    %v430 = vshrl.u32 %v429, 7
    %v431 = vsub.s32 %v256, %v430
    %v432 = vrot.slane %v401, %v431
    %v433 = vlaneseq
    %v434 = vshrl.u32 %v433, 7
    %v435 = vsub.s32 %v256, %v434
    %v436 = vrot.slane %v404, %v435
    %v437 = vsel %vm289, %v412, %v408
    %v438 = vsel %vm291, %v416, %v437
    %v439 = vsel %vm293, %v420, %v438
    %v440 = vsel %vm295, %v424, %v439
    %v441 = vsel %vm297, %v428, %v440
    %v442 = vsel %vm299, %v432, %v441
    %v443 = vsel %vm301, %v436, %v442
    %v445 = vsel %vm304, %v443, 0.0
    %446 = vadd.xlane.f32.xlu0 %v445
    %v447 = vpop.xlane.xlu0 %446
    %v448 = vlog2.pop %v447
    %v449 = vmul.f32 %v448, 0.6931472
    %v450 = vadd.f32 %v307, %v449
    %v451 = vld [vmem:[%s6] sm:$0xff]
    %v452 = vld [vmem:[%s6 + $0x8] sm:$0xff]
    %vm453 = vcmask 64512
    %v455 = vsel %vm453, %v451, 0
    %v458 = vsel %vm453, %v452, 0
    %460 = vmatprep.subr.mxu0 0.0
    %461 = vmatpush1.msra.mxu0 0.0
    %462 = vmatprep.subr.mxu0 0.0
    %463 = vmatpush1.msra.mxu0 0.0
    %464 = vmatprep.subr.mxu0 0.0
    %465 = vmatpush1.msra.mxu0 0.0
    %466 = vmatprep.subr.mxu0 0.0
    %467 = vmatpush1.msra.mxu0 0.0
    %468 = vmatprep.subr.mxu0 0.0
    %469 = vmatpush1.msra.mxu0 0.0
    %470 = vmatprep.subr.mxu0 0.0
    %471 = vmatpush1.msra.mxu0 0.0
    %472 = vmatprep.subr.mxu0 0.0
    %473 = vmatpush1.msra.mxu0 0.0
    %474 = vmatprep.subr.mxu0 0.0
    %475 = vmatpush1.msra.mxu0 0.0
    %476 = vmatprep.subr.mxu0 0.0
    %477 = vmatpush1.msra.mxu0 0.0
    %478 = vmatprep.subr.mxu0 0.0
    %479 = vmatpush1.msra.mxu0 0.0
    %480 = vmatprep.subr.mxu0 0.0
    %481 = vmatpush1.msra.mxu0 0.0
    %482 = vmatprep.subr.mxu0 0.0
    %483 = vmatpush1.msra.mxu0 0.0
    %484 = vmatprep.subr.mxu0 0.0
    %485 = vmatpush1.msra.mxu0 0.0
    %486 = vmatprep.subr.mxu0 0.0
    %487 = vmatpush1.msra.mxu0 0.0
    %488 = vmatprep.subr.mxu0 0.0
    %489 = vmatpush1.msra.mxu0 0.0
    %490 = vmatprep.subr.mxu0 0.0
    %491 = vmatpush1.msra.mxu0 %v450
    %492 = vmatprep.subr.mxu0 0.0
    %493 = vmatpush2.msra.mxu0 0.0
    %494 = vmatprep.subr.mxu0 0.0
    %495 = vmatpush2.msra.mxu0 0.0
    %496 = vmatprep.subr.mxu0 0.0
    %497 = vmatpush2.msra.mxu0 0.0
    %498 = vmatprep.subr.mxu0 0.0
    %499 = vmatpush2.msra.mxu0 0.0
    %500 = vmatprep.subr.mxu0 0.0
    %501 = vmatpush2.msra.mxu0 0.0
    %502 = vmatprep.subr.mxu0 0.0
    %503 = vmatpush2.msra.mxu0 0.0
    %504 = vmatprep.subr.mxu0 0.0
    %505 = vmatpush2.msra.mxu0 0.0
    %506 = vmatprep.subr.mxu0 0.0
    %507 = vmatpush2.msra.mxu0 0.0
    %508 = vmatprep.subr.mxu0 0.0
    %509 = vmatpush2.msra.mxu0 0.0
    %510 = vmatprep.subr.mxu0 0.0
    %511 = vmatpush2.msra.mxu0 0.0
    %512 = vmatprep.subr.mxu0 0.0
    %513 = vmatpush2.msra.mxu0 0.0
    %514 = vmatprep.subr.mxu0 0.0
    %515 = vmatpush2.msra.mxu0 0.0
    %516 = vmatprep.subr.mxu0 0.0
    %517 = vmatpush2.msra.mxu0 0.0
    %518 = vmatprep.subr.mxu0 0.0
    %519 = vmatpush2.msra.mxu0 0.0
    %520 = vmatprep.subr.mxu0 0.0
    %521 = vmatpush2.msra.mxu0 0.0
    %522 = vmatprep.subr.mxu0 0.0
    %523 = vmatpush2.msra.mxu0 0.0
    %524 = vmatprep.mubr.f32.mxu0 0.0
    %525 = vmatmul.mubr.f32.gmra.mxu0 %v455
    %v526 = vpop.f32.mrf.mxu0
    %v527 = vadd.f32 0.0, %v526
    %v528 = vpop.f32.mrf.mxu0
    %529 = vmatprep.mubr.f32.mxu0 0.0
    %530 = vmatmul.mubr.f32.gmra.mxu0 %v458
    %v531 = vpop.f32.mrf.mxu0
    %v532 = vadd.f32 0.0, %v531
    %v533 = vpop.f32.mrf.mxu0
    %534 = vdwg.mxu0
    %v535 = vsub.f32 %v175, %v527
    %v536 = vsub.f32 %v177, %v532
    %v537 = vmul.f32 %v535, 1.442695
    %v538 = vpow.pop %v537
    %v539 = vmul.f32 %v536, 1.442695
    %v540 = vpow.pop %v539
    %v541 = vld [vmem:[#allocation8] sm:$0x3]
    %v542 = vld [vmem:[%s5] sm:$0x3]
    %544 = vset.pattern.permute.xlu0 0
    %545 = vperm.xlu0 %544, %v538
    %v546 = vpop.permute.xlu0 %545
    %549 = vset.pattern.permute.xlu0 0
    %550 = vperm.xlu0 %549, %v540
    %v551 = vpop.permute.xlu0 %550
    %v553 = vmul.f32 %v153, %v546
    %v554 = vmul.f32 %v156, %v551
    %v556 = vsel %vm114, %v542, 0
    %558 = vmatprep.subr.mxu0 0.0
    %559 = vmatpush1.msra.mxu0 0.0
    %560 = vmatprep.subr.mxu0 0.0
    %561 = vmatpush1.msra.mxu0 0.0
    %562 = vmatprep.subr.mxu0 0.0
    %563 = vmatpush1.msra.mxu0 0.0
    %564 = vmatprep.subr.mxu0 0.0
    %565 = vmatpush1.msra.mxu0 0.0
    %566 = vmatprep.subr.mxu0 0.0
    %567 = vmatpush1.msra.mxu0 0.0
    %568 = vmatprep.subr.mxu0 0.0
    %569 = vmatpush1.msra.mxu0 0.0
    %570 = vmatprep.subr.mxu0 0.0
    %571 = vmatpush1.msra.mxu0 0.0
    %572 = vmatprep.subr.mxu0 0.0
    %573 = vmatpush1.msra.mxu0 0.0
    %574 = vmatprep.subr.mxu0 0.0
    %575 = vmatpush1.msra.mxu0 0.0
    %576 = vmatprep.subr.mxu0 0.0
    %577 = vmatpush1.msra.mxu0 0.0
    %578 = vmatprep.subr.mxu0 0.0
    %579 = vmatpush1.msra.mxu0 0.0
    %580 = vmatprep.subr.mxu0 0.0
    %581 = vmatpush1.msra.mxu0 0.0
    %582 = vmatprep.subr.mxu0 0.0
    %583 = vmatpush1.msra.mxu0 0.0
    %584 = vmatprep.subr.mxu0 0.0
    %585 = vmatpush1.msra.mxu0 0.0
    %586 = vmatprep.subr.mxu0 0.0
    %587 = vmatpush1.msra.mxu0 %v554
    %588 = vmatprep.subr.mxu0 0.0
    %589 = vmatpush1.msra.mxu0 %v553
    %590 = vmatprep.subr.mxu0 0.0
    %591 = vmatpush2.msra.mxu0 0.0
    %592 = vmatprep.subr.mxu0 0.0
    %593 = vmatpush2.msra.mxu0 0.0
    %594 = vmatprep.subr.mxu0 0.0
    %595 = vmatpush2.msra.mxu0 0.0
    %596 = vmatprep.subr.mxu0 0.0
    %597 = vmatpush2.msra.mxu0 0.0
    %598 = vmatprep.subr.mxu0 0.0
    %599 = vmatpush2.msra.mxu0 0.0
    %600 = vmatprep.subr.mxu0 0.0
    %601 = vmatpush2.msra.mxu0 0.0
    %602 = vmatprep.subr.mxu0 0.0
    %603 = vmatpush2.msra.mxu0 0.0
    %604 = vmatprep.subr.mxu0 0.0
    %605 = vmatpush2.msra.mxu0 0.0
    %606 = vmatprep.subr.mxu0 0.0
    %607 = vmatpush2.msra.mxu0 0.0
    %608 = vmatprep.subr.mxu0 0.0
    %609 = vmatpush2.msra.mxu0 0.0
    %610 = vmatprep.subr.mxu0 0.0
    %611 = vmatpush2.msra.mxu0 0.0
    %612 = vmatprep.subr.mxu0 0.0
    %613 = vmatpush2.msra.mxu0 0.0
    %614 = vmatprep.subr.mxu0 0.0
    %615 = vmatpush2.msra.mxu0 0.0
    %616 = vmatprep.subr.mxu0 0.0
    %617 = vmatpush2.msra.mxu0 0.0
    %618 = vmatprep.subr.mxu0 0.0
    %619 = vmatpush2.msra.mxu0 0.0
    %620 = vmatprep.subr.mxu0 0.0
    %621 = vmatpush2.msra.mxu0 0.0
    %622 = vmatprep.mubr.f32.mxu0 0.0
    %623 = vmatmul.mubr.f32.gmra.mxu0 %v556
    %v624 = vpop.f32.mrf.mxu0
    %v625 = vadd.f32 0.0, %v624
    %v626 = vpop.f32.mrf.mxu0
    %627 = vdwg.mxu0
    %v628 = vadd.f32 %v541, %v625
    %629 = vst [vmem:[#allocation8] sm:$0x3] %v628
    // Predicated region
    $region46: #{tpu_custom_call.1} parent=1 // pred_check
      _
    $region47: #{tpu_custom_call.1} parent=1 // pred_check_branch
      %631 = sbr.rel (0) target = $region49
    $region48: #{tpu_custom_call.1} parent=1 // pred_region
      %s633 = ssub.s32 32, 32
      %634 = vsyncadd [#allocation4], %s633
      %s636 = sshll.u32 [#allocation8], 4
      %s637 = int_to_ptr.vmem [resolvable:$true] %s636
      %639 = dma.vmem_to_hbm [thread:$0]  %s637, 32, %s7, [#allocation4]
    $region49: #{tpu_custom_call.1} parent=1 // pred_fallthru
      _
    // Predicated region
    $region50: #{tpu_custom_call.1} parent=1 // pred_check
      _
    $region51: #{tpu_custom_call.1} parent=1 // pred_check_branch
      %641 = sbr.rel (0) target = $region53
    $region52: #{tpu_custom_call.1} parent=1 // pred_region
      %642 = dma.done [#allocation4], 32
    $region53: #{tpu_custom_call.1} parent=1 // pred_fallthru
      _
    %643 = vsyncpa [#allocation3], 1
    %644 = vsyncpa [#allocation6], 1
    %645 = vsyncpa [#allocation4], 1

</llo_original>
